<compile_context>
chip_gen: v6e
topology: v6e:2x2x1
jax: 0.10.0
libtpu: 0.0.40
codegen_flags: <defaults>
</compile_context>

<pallas_src>
import functools

import jax
import jax.numpy as jnp
from jax.experimental import pallas as pl
from jax.experimental.pallas import tpu as pltpu


def critic_kernel(x_ref, w1_ref, b1_ref, w2_ref, b2_ref, w3_ref, b3_ref, o_ref):
    # Layer 1: cast the streamed f32 tile to bf16 only at the MXU input;
    # f32 accumulate; bias + ReLU in f32.
    x_bf = x_ref[...].astype(jnp.bfloat16)
    h1 = jnp.dot(x_bf, w1_ref[...], preferred_element_type=jnp.float32)
    h1 = jnp.maximum(h1 + b1_ref[...], 0.0)

    # Layer 2: re-cast activations to bf16 only for the MXU input.
    h2 = jnp.dot(h1.astype(jnp.bfloat16), w2_ref[...],
                 preferred_element_type=jnp.float32)
    h2 = jnp.maximum(h2 + b2_ref[...], 0.0)

    # Output head (H2 -> 1): VPU multiply + cross-lane sum (XLU) instead of an
    # N=1 MXU pass; b3 is an SMEM scalar.
    v = jnp.sum(h2 * w3_ref[...], axis=-1)                       # (TB,)

    # Lane-dense store: one (1, TB) row per tile.
    o_ref[...] = (v[None, :] + b3_ref[0, 0]).astype(o_ref.dtype)


def _ceil_to(x, m):
    return ((x + m - 1) // m) * m


def _choose_tile(batch, tile_b):
    """Pick an effective batch tile.

    Keeps the lane-dense output constraint (tile % 128 == 0 whenever there is
    more than one tile) and clamps to ~half the batch so the 'parallel' grid
    axis has >= 2 steps for v7x's two TensorCores (harmless on v5e/v6e).
    """
    if batch <= 128:
        return _ceil_to(batch, 8)                 # single tiny tile
    two_way = _ceil_to(-(-batch // 2), 128)       # >= 2 tiles when possible
    return max(128, min(_ceil_to(tile_b, 128), two_way))


@functools.partial(jax.jit, static_argnames=("tile_b",))
def critic_forward(x, w1, b1, w2, b2, w3, b3, *, tile_b=2048):
    """x: (B, D) f32. Weights stored as (in, out); w3 as (1, H2); b3 as (1, 1)."""
    B, D = x.shape
    H1 = w1.shape[1]
    H2 = w2.shape[1]

    tile = _choose_tile(B, tile_b)
    num_tiles = -(-B // tile)
    B_pad = num_tiles * tile                      # output is padded; x is NOT

    # bf16 MXU weight inputs (no-op if pre-cast outside the jit, see
    # prepare_critic_params).
    w1_bf = w1.astype(jnp.bfloat16)
    w2_bf = w2.astype(jnp.bfloat16)

    cost = pl.CostEstimate(
        flops=2 * B_pad * (D * H1 + H1 * H2 + H2),
        transcendentals=0,
        bytes_accessed=(B * D * 4                       # x (f32, read once)
                        + D * H1 * 2 + H1 * H2 * 2      # bf16 weights
                        + (H1 + H2 + H2 + 1) * 4        # biases + head
                        + B_pad * 4),                   # output
    )

    out = pl.pallas_call(
        critic_kernel,
        out_shape=jax.ShapeDtypeStruct((1, B_pad), jnp.float32),
        grid=(num_tiles,),
        in_specs=[
            pl.BlockSpec((tile, D), lambda i: (i, 0)),      # x tile (streamed, f32)
            pl.BlockSpec((D, H1), lambda i: (0, 0)),        # w1 (resident, bf16)
            pl.BlockSpec((1, H1), lambda i: (0, 0)),        # b1 (resident, f32)
            pl.BlockSpec((H1, H2), lambda i: (0, 0)),       # w2 (resident, bf16)
            pl.BlockSpec((1, H2), lambda i: (0, 0)),        # b2 (resident, f32)
            pl.BlockSpec((1, H2), lambda i: (0, 0)),        # w3 row (resident, f32)
            pl.BlockSpec(memory_space=pltpu.MemorySpace.SMEM),  # b3 scalar
        ],
        out_specs=pl.BlockSpec((1, tile), lambda i: (0, i)),    # lane-dense
        compiler_params=pltpu.CompilerParams(
            dimension_semantics=("parallel",),
            vmem_limit_bytes=48 * 1024 * 1024,
        ),
        cost_estimate=cost,
    )(x, w1_bf, b1, w2_bf, b2, w3, b3)

    # Back to the PyTorch (B, 1) value shape; drops padded tail columns.
    return out[0, :B].reshape(B, 1)


def prepare_critic_params(w1, b1, w2, b2, w3, b3):
    """Pre-cast the static matmul weights to bf16 once (outside the jit)."""
    return (w1.astype(jnp.bfloat16), b1, w2.astype(jnp.bfloat16), b2, w3, b3)


def init_linear_params(key, in_dim, out_dim):
    """PyTorch-style nn.Linear init: U(-1/sqrt(in), 1/sqrt(in)).

    Weights are stored pre-transposed as (in, out) so the kernel computes
    x @ W + b directly.
    """
    kw, kb = jax.random.split(key)
    bound = 1.0 / jnp.sqrt(jnp.float32(in_dim))
    w = jax.random.uniform(kw, (in_dim, out_dim), jnp.float32, -bound, bound)
    b = jax.random.uniform(kb, (1, out_dim), jnp.float32, -bound, bound)
    return w, b


def reference_forward(x, w1, b1, w2, b2, w3, b3):
    """Pure-JAX mirror of the kernel math (same bf16 MXU-input casts)."""
    h1 = jnp.dot(x.astype(jnp.bfloat16), w1.astype(jnp.bfloat16),
                 preferred_element_type=jnp.float32)
    h1 = jnp.maximum(h1 + b1, 0.0)
    h2 = jnp.dot(h1.astype(jnp.bfloat16), w2.astype(jnp.bfloat16),
                 preferred_element_type=jnp.float32)
    h2 = jnp.maximum(h2 + b2, 0.0)
    return jnp.sum(h2 * w3, axis=-1, keepdims=True) + b3


if __name__ == "__main__":
    # Small shapes consistent with the module (hidden_dims default (256, 256)),
    # with a batch that exercises multiple grid steps and a partial final tile.
    B, INPUT_DIM = 200, 16
    H1, H2 = 256, 256

    key = jax.random.PRNGKey(0)
    kx, k1, k2, k3 = jax.random.split(key, 4)

    x = jax.random.normal(kx, (B, INPUT_DIM), jnp.float32)
    w1, b1 = init_linear_params(k1, INPUT_DIM, H1)
    w2, b2 = init_linear_params(k2, H1, H2)
    w3_t, b3 = init_linear_params(k3, H2, 1)   # (H2, 1), (1, 1)
    w3 = w3_t.T                                # kernel expects (1, H2) row

    params = prepare_critic_params(w1, b1, w2, b2, w3, b3)

    out = critic_forward(x, *params, tile_b=2048)
    out = jax.block_until_ready(out)

    ref = reference_forward(x, w1, b1, w2, b2, w3, b3)
    assert out.shape == (B, 1)
    assert jnp.allclose(out, ref, atol=2e-3, rtol=2e-3), (
        float(jnp.max(jnp.abs(out - ref))))

    print("KERNEL_OK")
</pallas_src>

<mosaic_0001>
module attributes {stable_mosaic.version = 11 : i64} {
  func.func @critic_kernel(%arg0: i32, %arg1: memref<128x16xf32, #tpu.memory_space<vmem>>, %arg2: memref<16x256xbf16, #tpu.memory_space<vmem>>, %arg3: memref<1x256xf32, #tpu.memory_space<vmem>>, %arg4: memref<256x256xbf16, #tpu.memory_space<vmem>>, %arg5: memref<1x256xf32, #tpu.memory_space<vmem>>, %arg6: memref<1x256xf32, #tpu.memory_space<vmem>>, %arg7: memref<1x1xf32, #tpu.memory_space<smem>>, %arg8: memref<1x128xf32, #tpu.memory_space<vmem>>) attributes {dimension_semantics = [#tpu.dimension_semantics<parallel>], iteration_bounds = array<i64: 2>, scalar_prefetch = 0 : i64, scratch_operands = 0 : i64, tpu.core_type = #tpu.core_type<tc>, window_params = [{transform_indices = @transform_0, window_bounds = array<i64: 128, 16>}, {pipeline_mode = #tpu.pipeline_mode<synchronous>, transform_indices = @transform_1, window_bounds = array<i64: 16, 256>}, {pipeline_mode = #tpu.pipeline_mode<synchronous>, transform_indices = @transform_2, window_bounds = array<i64: 1, 256>}, {pipeline_mode = #tpu.pipeline_mode<synchronous>, transform_indices = @transform_3, window_bounds = array<i64: 256, 256>}, {pipeline_mode = #tpu.pipeline_mode<synchronous>, transform_indices = @transform_4, window_bounds = array<i64: 1, 256>}, {pipeline_mode = #tpu.pipeline_mode<synchronous>, transform_indices = @transform_5, window_bounds = array<i64: 1, 256>}, {transform_indices = @transform_6, window_bounds = array<i64: 1, 1>}, {transform_indices = @transform_7, window_bounds = array<i64: 1, 128>}]} {
    %c0 = arith.constant 0 : index
    %c0_0 = arith.constant 0 : index
    %0 = vector.load %arg1[%c0, %c0_0] : memref<128x16xf32, #tpu.memory_space<vmem>>, vector<128x16xf32>
    %1 = arith.truncf %0 : vector<128x16xf32> to vector<128x16xbf16>
    %c0_1 = arith.constant 0 : index
    %c0_2 = arith.constant 0 : index
    %2 = vector.load %arg2[%c0_1, %c0_2] : memref<16x256xbf16, #tpu.memory_space<vmem>>, vector<16x256xbf16>
    %cst = arith.constant dense<0.000000e+00> : vector<128x256xf32>
    %3 = tpu.matmul %1, %2, %cst {dimension_numbers = #tpu.dot_dimension_numbers<[1], [0], [0], [1], [0, 0, 1, 1], [], []>} : vector<128x16xbf16>, vector<16x256xbf16>, vector<128x256xf32> -> vector<128x256xf32>
    %c0_3 = arith.constant 0 : index
    %c0_4 = arith.constant 0 : index
    %4 = vector.load %arg3[%c0_3, %c0_4] : memref<1x256xf32, #tpu.memory_space<vmem>>, vector<1x256xf32>
    %5 = vector.broadcast %4 : vector<1x256xf32> to vector<128x256xf32>
    %6 = arith.addf %3, %5 : vector<128x256xf32>
    %cst_5 = arith.constant 0.000000e+00 : f32
    %7 = vector.broadcast %cst_5 : f32 to vector<128x256xf32>
    %8 = arith.maximumf %6, %7 : vector<128x256xf32>
    %9 = arith.truncf %8 : vector<128x256xf32> to vector<128x256xbf16>
    %c0_6 = arith.constant 0 : index
    %c0_7 = arith.constant 0 : index
    %10 = vector.load %arg4[%c0_6, %c0_7] : memref<256x256xbf16, #tpu.memory_space<vmem>>, vector<256x256xbf16>
    %cst_8 = arith.constant dense<0.000000e+00> : vector<128x256xf32>
    %11 = tpu.matmul %9, %10, %cst_8 {dimension_numbers = #tpu.dot_dimension_numbers<[1], [0], [0], [1], [0, 0, 1, 1], [], []>} : vector<128x256xbf16>, vector<256x256xbf16>, vector<128x256xf32> -> vector<128x256xf32>
    %c0_9 = arith.constant 0 : index
    %c0_10 = arith.constant 0 : index
    %12 = vector.load %arg5[%c0_9, %c0_10] : memref<1x256xf32, #tpu.memory_space<vmem>>, vector<1x256xf32>
    %13 = vector.broadcast %12 : vector<1x256xf32> to vector<128x256xf32>
    %14 = arith.addf %11, %13 : vector<128x256xf32>
    %cst_11 = arith.constant 0.000000e+00 : f32
    %15 = vector.broadcast %cst_11 : f32 to vector<128x256xf32>
    %16 = arith.maximumf %14, %15 : vector<128x256xf32>
    %c0_12 = arith.constant 0 : index
    %c0_13 = arith.constant 0 : index
    %17 = vector.load %arg6[%c0_12, %c0_13] : memref<1x256xf32, #tpu.memory_space<vmem>>, vector<1x256xf32>
    %18 = vector.broadcast %17 : vector<1x256xf32> to vector<128x256xf32>
    %19 = arith.mulf %16, %18 : vector<128x256xf32>
    %cst_14 = arith.constant dense<0.000000e+00> : vector<128xf32>
    %20 = vector.multi_reduction <add>, %19, %cst_14 [1] : vector<128x256xf32> to vector<128xf32>
    %21 = vector.shape_cast %20 : vector<128xf32> to vector<1x128xf32>
    %c0_15 = arith.constant 0 : index
    %c0_16 = arith.constant 0 : index
    %22 = memref.load %arg7[%c0_15, %c0_16] : memref<1x1xf32, #tpu.memory_space<smem>>
    %23 = vector.broadcast %22 : f32 to vector<1x128xf32>
    %24 = arith.addf %21, %23 : vector<1x128xf32>
    %c0_17 = arith.constant 0 : index
    %c0_18 = arith.constant 0 : index
    %25 = vector.load %arg8[%c0_17, %c0_18] : memref<1x128xf32, #tpu.memory_space<vmem>>, vector<1x128xf32>
    tpu.vector_store %arg8[%c0_17, %c0_18], %24 {strides = array<i32>} : memref<1x128xf32, #tpu.memory_space<vmem>>, vector<1x128xf32>,
    return
  }
  func.func @transform_0(%arg0: i32) -> (i32, i32) {
    %c0_i32 = arith.constant 0 : i32
    %c0_i32_0 = arith.constant 0 : i32
    return %arg0, %c0_i32 : i32, i32
  }
  func.func @transform_1(%arg0: i32) -> (i32, i32) {
    %c0_i32 = arith.constant 0 : i32
    %c0_i32_0 = arith.constant 0 : i32
    %c0_i32_1 = arith.constant 0 : i32
    return %c0_i32, %c0_i32_0 : i32, i32
  }
  func.func @transform_2(%arg0: i32) -> (i32, i32) {
    %c0_i32 = arith.constant 0 : i32
    %c0_i32_0 = arith.constant 0 : i32
    %c0_i32_1 = arith.constant 0 : i32
    return %c0_i32, %c0_i32_0 : i32, i32
  }
  func.func @transform_3(%arg0: i32) -> (i32, i32) {
    %c0_i32 = arith.constant 0 : i32
    %c0_i32_0 = arith.constant 0 : i32
    %c0_i32_1 = arith.constant 0 : i32
    return %c0_i32, %c0_i32_0 : i32, i32
  }
  func.func @transform_4(%arg0: i32) -> (i32, i32) {
    %c0_i32 = arith.constant 0 : i32
    %c0_i32_0 = arith.constant 0 : i32
    %c0_i32_1 = arith.constant 0 : i32
    return %c0_i32, %c0_i32_0 : i32, i32
  }
  func.func @transform_5(%arg0: i32) -> (i32, i32) {
    %c0_i32 = arith.constant 0 : i32
    %c0_i32_0 = arith.constant 0 : i32
    %c0_i32_1 = arith.constant 0 : i32
    return %c0_i32, %c0_i32_0 : i32, i32
  }
  func.func @transform_6(%arg0: i32) -> (i32, i32) {
    %c0_i32 = arith.constant 0 : i32
    %c0_i32_0 = arith.constant 0 : i32
    %c0_i32_1 = arith.constant 0 : i32
    return %c0_i32, %c0_i32_0 : i32, i32
  }
  func.func @transform_7(%arg0: i32) -> (i32, i32) {
    %c0_i32 = arith.constant 0 : i32
    %c0_i32_0 = arith.constant 0 : i32
    return %c0_i32, %arg0 : i32, i32
  }
}

</mosaic_0001>

<llo_original>
// kernel: critic_forward.1
$region0: #{critic_forward.1}
  #allocation0 [shape = 'u32[]', space=smem, size = 0x4, offset = 0x4, fixed_abs, tag = 'smem constant byte address 0x4 - core index']
  #allocation1 [shape = 'u32[144,128]{1,0:T(1,128)}', space=vmem, size = 0x12000, scoped, tag = 'internal scratch']
  #allocation2 [shape = 'f32[1,1]{1,0:T(1,128)S(6)}', space=smem, size = 0x200, scoped, tag = 'scoped memory for critic_forward.1']
  %s0 = inlined_call_operand.vmem [shape: f32[200,16], index: 0, kind: input, shape index: {}]
  %s1 = inlined_call_operand.vmem [shape: bf16[16,256], index: 1, kind: input, shape index: {}]
  %s2 = inlined_call_operand.vmem [shape: f32[1,256], index: 2, kind: input, shape index: {}]
  %s3 = inlined_call_operand.hbm [shape: bf16[256,256], index: 3, kind: input, shape index: {}]
  %s4 = inlined_call_operand.vmem [shape: f32[1,256], index: 4, kind: input, shape index: {}]
  %s5 = inlined_call_operand.vmem [shape: f32[1,256], index: 5, kind: input, shape index: {}]
  %s6 = inlined_call_operand.<no memory space> [shape: f32[1,1], index: 6, kind: input, shape index: {}]
  %s7 = inlined_call_operand.vmem [shape: f32[1,256], index: 7, kind: output, shape index: {}]
  %s8 = sld [smem:[#allocation0]]
  $region65: #{critic_forward.1} parent=0
    _
  %s10 = ssub.s32 1, %s8
  %s11 = scalar_select 0, %s10, %s8
  %12 = sst [smem:[#allocation2]] %s6
  $region1: #{critic_forward.1} parent=0
    #allocation3 [shape = 'u8[131072]{0}', space=vmem, size = 0x20000, scoped, tag = 'input window, operand 3, single buffered']
    #allocation4 [shape = 's32[2]{0}', space=sflag, size = 0x8, scoped, tag = 'scoped memory for critic_forward.1']
    %13 = vsyncpa [#allocation4], 0
    loop: start=0, step=1, limit=4
    $region2: #{critic_forward.1} parent=1 // loop_pre_header
      _
    $region3: #{critic_forward.1} parent=1 // loop_header
      %s15 = sphi 0, %s19
      %p16 = scmp.ge.s32.totalorder %s15, 4
      %s25 = sphi 0, %s27
      %s28 = sphi 0, %s25
      %s29 = sphi 0, %s28
      %s45 = sphi 0, %s29
      %s49 = sphi 0, %s49
      %s51 = sphi 0, %s49
      %s52 = sphi 0, %s51
      %s66 = sphi 0, %s52
      %s70 = sphi 0, %s70
      %s72 = sphi 0, %s70
      %s73 = sphi 0, %s72
      %s87 = sphi 0, %s73
      %s91 = sphi 0, %s91
      %s93 = sphi 0, %s91
      %s94 = sphi 0, %s93
      %s108 = sphi 0, %s94
      %s112 = sphi 0, %s112
      %s114 = sphi 0, %s112
      %s115 = sphi 0, %s114
      %s129 = sphi 0, %s115
      %s133 = sphi 0, %s133
      %s135 = sphi 0, %s133
      %s136 = sphi 0, %s135
      %s150 = sphi 0, %s136
      %s154 = sphi 0, %s154
      %s156 = sphi 0, %s154
      %s157 = sphi 0, %s156
      %s171 = sphi 0, %s157
      %s177 = sphi 0, %s179
      %s180 = sphi 0, %s177
      %s181 = sphi 0, %s180
      %s197 = sphi 0, %s181
    $region4: #{critic_forward.1} parent=1 // loop_header_branch
      %18 = sbr.rel (%p16) target = $region8
    $region5: #{critic_forward.1} parent=1 // loop_body
      %s20 = ssub.s32 %s15, 1
      %s21 = ssub.s32 %s15, 2
      %s22 = sadd.s32 %s15, 1
      %s23 = ssub.s32 %s15, %s22
      %p24 = scmp.eq.s32.totalorder %s23, 0
      %s26 = sadd.s32 %s25, 1
      %s27 = scalar_select %p24, %s25, %s26
      %p30 = pneg %p24
      %p31 = scmp.eq.s32.totalorder %s15, 1
      %p32 = por %p30, %p31
      %p33 = scmp.ne.s32.totalorder %s25, %s28
      %p34 = scmp.eq.s32.totalorder %s15, 0
      %p35 = por %p33, %p34
      %p36 = scmp.ne.s32.totalorder %s25, %s28
      %p37 = scmp.eq.s32.totalorder %s20, 1
      %p38 = por %p36, %p37
      %p39 = scmp.ne.s32.totalorder %s28, %s29
      %p40 = scmp.eq.s32.totalorder %s20, 0
      %p41 = por %p39, %p40
      %p42 = scmp.ne.s32.totalorder %s28, %s29
      %p43 = scmp.eq.s32.totalorder %s21, 1
      %p44 = por %p42, %p43
      %p46 = scmp.ne.s32.totalorder %s29, %s45
      %p47 = scmp.eq.s32.totalorder %s21, 0
      %p48 = por %p46, %p47
      %s50 = sadd.s32 %s49, 1
      %p53 = scmp.eq.s32.totalorder %s15, 1
      %p54 = scmp.ne.s32.totalorder %s49, %s51
      %p55 = scmp.eq.s32.totalorder %s15, 0
      %p56 = por %p54, %p55
      %p57 = scmp.ne.s32.totalorder %s49, %s51
      %p58 = scmp.eq.s32.totalorder %s20, 1
      %p59 = por %p57, %p58
      %p60 = scmp.ne.s32.totalorder %s51, %s52
      %p61 = scmp.eq.s32.totalorder %s20, 0
      %p62 = por %p60, %p61
      %p63 = scmp.ne.s32.totalorder %s51, %s52
      %p64 = scmp.eq.s32.totalorder %s21, 1
      %p65 = por %p63, %p64
      %p67 = scmp.ne.s32.totalorder %s52, %s66
      %p68 = scmp.eq.s32.totalorder %s21, 0
      %p69 = por %p67, %p68
      %s71 = sadd.s32 %s70, 1
      %p74 = scmp.eq.s32.totalorder %s15, 1
      %p75 = scmp.ne.s32.totalorder %s70, %s72
      %p76 = scmp.eq.s32.totalorder %s15, 0
      %p77 = por %p75, %p76
      %p78 = scmp.ne.s32.totalorder %s70, %s72
      %p79 = scmp.eq.s32.totalorder %s20, 1
      %p80 = por %p78, %p79
      %p81 = scmp.ne.s32.totalorder %s72, %s73
      %p82 = scmp.eq.s32.totalorder %s20, 0
      %p83 = por %p81, %p82
      %p84 = scmp.ne.s32.totalorder %s72, %s73
      %p85 = scmp.eq.s32.totalorder %s21, 1
      %p86 = por %p84, %p85
      %p88 = scmp.ne.s32.totalorder %s73, %s87
      %p89 = scmp.eq.s32.totalorder %s21, 0
      %p90 = por %p88, %p89
      %s92 = sadd.s32 %s91, 1
      %p95 = scmp.eq.s32.totalorder %s15, 1
      %p96 = scmp.ne.s32.totalorder %s91, %s93
      %p97 = scmp.eq.s32.totalorder %s15, 0
      %p98 = por %p96, %p97
      %p99 = scmp.ne.s32.totalorder %s91, %s93
      %p100 = scmp.eq.s32.totalorder %s20, 1
      %p101 = por %p99, %p100
      %p102 = scmp.ne.s32.totalorder %s93, %s94
      %p103 = scmp.eq.s32.totalorder %s20, 0
      %p104 = por %p102, %p103
      %p105 = scmp.ne.s32.totalorder %s93, %s94
      %p106 = scmp.eq.s32.totalorder %s21, 1
      %p107 = por %p105, %p106
      %p109 = scmp.ne.s32.totalorder %s94, %s108
      %p110 = scmp.eq.s32.totalorder %s21, 0
      %p111 = por %p109, %p110
      %s113 = sadd.s32 %s112, 1
      %p116 = scmp.eq.s32.totalorder %s15, 1
      %p117 = scmp.ne.s32.totalorder %s112, %s114
      %p118 = scmp.eq.s32.totalorder %s15, 0
      %p119 = por %p117, %p118
      %p120 = scmp.ne.s32.totalorder %s112, %s114
      %p121 = scmp.eq.s32.totalorder %s20, 1
      %p122 = por %p120, %p121
      %p123 = scmp.ne.s32.totalorder %s114, %s115
      %p124 = scmp.eq.s32.totalorder %s20, 0
      %p125 = por %p123, %p124
      %p126 = scmp.ne.s32.totalorder %s114, %s115
      %p127 = scmp.eq.s32.totalorder %s21, 1
      %p128 = por %p126, %p127
      %p130 = scmp.ne.s32.totalorder %s115, %s129
      %p131 = scmp.eq.s32.totalorder %s21, 0
      %p132 = por %p130, %p131
      %s134 = sadd.s32 %s133, 1
      %p137 = scmp.eq.s32.totalorder %s15, 1
      %p138 = scmp.ne.s32.totalorder %s133, %s135
      %p139 = scmp.eq.s32.totalorder %s15, 0
      %p140 = por %p138, %p139
      %p141 = scmp.ne.s32.totalorder %s133, %s135
      %p142 = scmp.eq.s32.totalorder %s20, 1
      %p143 = por %p141, %p142
      %p144 = scmp.ne.s32.totalorder %s135, %s136
      %p145 = scmp.eq.s32.totalorder %s20, 0
      %p146 = por %p144, %p145
      %p147 = scmp.ne.s32.totalorder %s135, %s136
      %p148 = scmp.eq.s32.totalorder %s21, 1
      %p149 = por %p147, %p148
      %p151 = scmp.ne.s32.totalorder %s136, %s150
      %p152 = scmp.eq.s32.totalorder %s21, 0
      %p153 = por %p151, %p152
      %s155 = sadd.s32 %s154, 1
      %p158 = scmp.eq.s32.totalorder %s15, 1
      %p159 = scmp.ne.s32.totalorder %s154, %s156
      %p160 = scmp.eq.s32.totalorder %s15, 0
      %p161 = por %p159, %p160
      %p162 = scmp.ne.s32.totalorder %s154, %s156
      %p163 = scmp.eq.s32.totalorder %s20, 1
      %p164 = por %p162, %p163
      %p165 = scmp.ne.s32.totalorder %s156, %s157
      %p166 = scmp.eq.s32.totalorder %s20, 0
      %p167 = por %p165, %p166
      %p168 = scmp.ne.s32.totalorder %s156, %s157
      %p169 = scmp.eq.s32.totalorder %s21, 1
      %p170 = por %p168, %p169
      %p172 = scmp.ne.s32.totalorder %s157, %s171
      %p173 = scmp.eq.s32.totalorder %s21, 0
      %p174 = por %p172, %p173
      %s175 = ssub.s32 %s15, %s22
      %p176 = scmp.eq.s32.totalorder %s175, 0
      %s178 = sadd.s32 %s177, 1
      %s179 = scalar_select %p176, %s177, %s178
      %p182 = pneg %p176
      %p183 = scmp.eq.s32.totalorder %s15, 1
      %p184 = por %p182, %p183
      %p185 = scmp.ne.s32.totalorder %s177, %s180
      %p186 = scmp.eq.s32.totalorder %s15, 0
      %p187 = por %p185, %p186
      %p188 = scmp.ne.s32.totalorder %s177, %s180
      %p189 = scmp.eq.s32.totalorder %s20, 1
      %p190 = por %p188, %p189
      %p191 = scmp.ne.s32.totalorder %s180, %s181
      %p192 = scmp.eq.s32.totalorder %s20, 0
      %p193 = por %p191, %p192
      %p194 = scmp.ne.s32.totalorder %s180, %s181
      %p195 = scmp.eq.s32.totalorder %s21, 1
      %p196 = por %p194, %p195
      %p198 = scmp.ne.s32.totalorder %s181, %s197
      %p199 = scmp.eq.s32.totalorder %s21, 0
      %p200 = por %p198, %p199
      %p201 = scmp.le.s32.totalorder 1, %s15
      %p202 = scmp.lt.s32.totalorder %s15, 3
      %p203 = pnand %p201, %p202
      %p204 = pneg %p203
      // Predicated region
      $region9: #{critic_forward.1} parent=5 // pred_check
        _
      $region10: #{critic_forward.1} parent=5 // pred_check_branch
        %206 = sbr.rel (%p203) target = $region12
      $region11: #{critic_forward.1} parent=5 // pred_region
        %s207 = ssub.s32 %s15, 1
        // Predicated region
        $region13: #{critic_forward.1} parent=11 // pred_check
          %p208 = pneg %p62
        $region14: #{critic_forward.1} parent=11 // pred_check_branch
          %210 = sbr.rel (%p208) target = $region16
        $region15: #{critic_forward.1} parent=11 // pred_region
          _
        $region16: #{critic_forward.1} parent=11 // pred_fallthru
          _
        // Predicated region
        $region17: #{critic_forward.1} parent=11 // pred_check
          %p211 = pneg %p83
        $region18: #{critic_forward.1} parent=11 // pred_check_branch
          %213 = sbr.rel (%p211) target = $region20
        $region19: #{critic_forward.1} parent=11 // pred_region
          _
        $region20: #{critic_forward.1} parent=11 // pred_fallthru
          _
        // Predicated region
        $region21: #{critic_forward.1} parent=11 // pred_check
          %p214 = pneg %p104
        $region22: #{critic_forward.1} parent=11 // pred_check_branch
          %216 = sbr.rel (%p214) target = $region24
        $region23: #{critic_forward.1} parent=11 // pred_region
          %s218 = ssub.s32 4096, 4096
          %219 = vsyncadd [#allocation4], %s218
          %s220 = sshll.u32 [#allocation3], 4
          %s221 = int_to_ptr.vmem [resolvable:$true] %s220
          %226 = dma.hbm_to_vmem [thread:$0]  %s3, 4096, %s221, [#allocation4], 128, 128, 8
        $region24: #{critic_forward.1} parent=11 // pred_fallthru
          _
        // Predicated region
        $region25: #{critic_forward.1} parent=11 // pred_check
          %p227 = pneg %p125
        $region26: #{critic_forward.1} parent=11 // pred_check_branch
          %229 = sbr.rel (%p227) target = $region28
        $region27: #{critic_forward.1} parent=11 // pred_region
          _
        $region28: #{critic_forward.1} parent=11 // pred_fallthru
          _
        // Predicated region
        $region29: #{critic_forward.1} parent=11 // pred_check
          %p230 = pneg %p146
        $region30: #{critic_forward.1} parent=11 // pred_check_branch
          %232 = sbr.rel (%p230) target = $region32
        $region31: #{critic_forward.1} parent=11 // pred_region
          _
        $region32: #{critic_forward.1} parent=11 // pred_fallthru
          _
        // Predicated region
        $region33: #{critic_forward.1} parent=11 // pred_check
          %p233 = pneg %p167
        $region34: #{critic_forward.1} parent=11 // pred_check_branch
          %235 = sbr.rel (%p233) target = $region36
        $region35: #{critic_forward.1} parent=11 // pred_region
          _
        $region36: #{critic_forward.1} parent=11 // pred_fallthru
          _
      $region12: #{critic_forward.1} parent=5 // pred_fallthru
        _
      %p236 = scmp.lt.s32.totalorder %s15, 2
      // Predicated region
      $region37: #{critic_forward.1} parent=5 // pred_check
        %p237 = pneg %p236
      $region38: #{critic_forward.1} parent=5 // pred_check_branch
        %239 = sbr.rel (%p237) target = $region40
      $region39: #{critic_forward.1} parent=5 // pred_region
        // Predicated region
        $region41: #{critic_forward.1} parent=39 // pred_check
          %p240 = pneg %p35
        $region42: #{critic_forward.1} parent=39 // pred_check_branch
          %242 = sbr.rel (%p240) target = $region44
        $region43: #{critic_forward.1} parent=39 // pred_region
          %s243 = smul.u32 16, %s15
          %s244 = ssub.s32 25, %s243
          %p245 = scmp.lt.s32.totalorder %s244, 16
          %s246 = scalar_select %p245, %s244, 16
          %s247 = smul.u32 128, %s246
          %p248 = scmp.lt.s32.totalorder %s243, 24
          %s249 = scalar_select %p248, %s243, 24
          %s250 = smul.addr %s249, 8
          %s251 = scalar_lea.vmem %s0, %s250
          %s252 = smul.u32 16, %s15
          %s253 = ssub.s32 25, %s252
          %p254 = scmp.lt.s32.totalorder %s253, 16
          %s255 = scalar_select %p254, %s253, 16
          %s256 = smul.u32 128, %s255
        $region44: #{critic_forward.1} parent=39 // pred_fallthru
          _
      $region40: #{critic_forward.1} parent=5 // pred_fallthru
        _
      %p257 = scmp.le.s32.totalorder 1, %s15
      %p258 = scmp.lt.s32.totalorder %s15, 3
      %p259 = pnand %p257, %p258
      %p260 = pneg %p259
      // Predicated region
      $region45: #{critic_forward.1} parent=5 // pred_check
        _
      $region46: #{critic_forward.1} parent=5 // pred_check_branch
        %262 = sbr.rel (%p259) target = $region48
      $region47: #{critic_forward.1} parent=5 // pred_region
        %s263 = ssub.s32 %s15, 1
        // Predicated region
        $region49: #{critic_forward.1} parent=47 // pred_check
          %p264 = pneg %p104
        $region50: #{critic_forward.1} parent=47 // pred_check_branch
          %266 = sbr.rel (%p264) target = $region52
        $region51: #{critic_forward.1} parent=47 // pred_region
          %267 = dma.done [#allocation4], 4096
        $region52: #{critic_forward.1} parent=47 // pred_fallthru
          _
        %s268 = smul.u32 16, %s20
        %s269 = ssub.s32 25, %s268
        %p270 = scmp.lt.s32.totalorder %s269, 16
        %s271 = scalar_select %p270, %s269, 16
        %s272 = smul.u32 128, %s271
        %p273 = scmp.lt.s32.totalorder %s268, 24
        %s274 = scalar_select %p273, %s268, 24
        %s275 = smul.addr %s274, 8
        %s276 = scalar_lea.vmem %s0, %s275
        %p277 = pneg %p41
        %p278 = pneg %p38
        %p279 = pneg %p62
        %p280 = pneg %p59
        %p281 = pneg %p83
        %p282 = pneg %p80
        %p283 = pneg %p104
        %p284 = pneg %p101
        %p285 = pneg %p125
        %p286 = pneg %p122
        %p287 = pneg %p146
        %p288 = pneg %p143
        %p289 = pneg %p167
        %p290 = pneg %p164
        %p291 = pneg %p193
        %p292 = pneg %p190
        %p293 = scmp.lt.s32.totalorder %s20, 1
        %s294 = scalar_select %p293, %s20, 1
        %s295 = scalar_lea.vmem %s7, %s294
        %s296 = smul.u32 16, %s20
        %s297 = ssub.s32 25, %s296
        %p298 = scmp.lt.s32.totalorder %s297, 16
        %s299 = scalar_select %p298, %s297, 16
        %s300 = smul.u32 128, %s299
        %p301 = scmp.lt.s32.totalorder %s296, 24
        %s302 = scalar_select %p301, %s296, 24
        %s303 = smul.addr %s302, 8
        %s304 = scalar_lea.vmem %s0, %s303
        %s305 = smul.u32 16, %s20
        %s306 = ssub.s32 25, %s305
        %p307 = scmp.lt.s32.totalorder %s306, 16
        %s308 = scalar_select %p307, %s306, 16
        %s309 = smul.u32 128, %s308
        %p310 = scmp.lt.s32.totalorder %s20, 1
        %s311 = scalar_select %p310, %s20, 1
        %s312 = scalar_lea.vmem %s7, %s311
        %v314 = vld [vmem:[%s304] sm:$0xff]
        %v315 = vld [vmem:[%s304 + $0x8] sm:$0xff]
        %v316 = vld [vmem:[%s304 + $0x10] sm:$0xff]
        %v317 = vld [vmem:[%s304 + $0x18] sm:$0xff]
        %v318 = vld [vmem:[%s304 + $0x20] sm:$0xff]
        %v319 = vld [vmem:[%s304 + $0x28] sm:$0xff]
        %v320 = vld [vmem:[%s304 + $0x30] sm:$0xff]
        %v321 = vld [vmem:[%s304 + $0x38] sm:$0xff]
        %v322 = vld [vmem:[%s304 + $0x40] sm:$0xff]
        %v323 = vld [vmem:[%s304 + $0x48] sm:$0xff]
        %v324 = vld [vmem:[%s304 + $0x50] sm:$0xff]
        %v325 = vld [vmem:[%s304 + $0x58] sm:$0xff]
        %v326 = vld [vmem:[%s304 + $0x60] sm:$0xff]
        %v327 = vld [vmem:[%s304 + $0x68] sm:$0xff]
        %v328 = vld [vmem:[%s304 + $0x70] sm:$0xff]
        %v329 = vld [vmem:[%s304 + $0x78] sm:$0xff]
        %v330 = vpack.c.bf16 %v315, %v314
        %v331 = vpack.c.bf16 %v317, %v316
        %v332 = vpack.c.bf16 %v319, %v318
        %v333 = vpack.c.bf16 %v321, %v320
        %v334 = vpack.c.bf16 %v323, %v322
        %v335 = vpack.c.bf16 %v325, %v324
        %v336 = vpack.c.bf16 %v327, %v326
        %v337 = vpack.c.bf16 %v329, %v328
        %v338 = vld [vmem:[%s1] sm:$0xff]
        %v339 = vld [vmem:[%s1 + $0x8] sm:$0xff]
        %v340 = vld [vmem:[%s2] sm:$0x3]
        %v342 = vlaneseq
        %v343 = vshrl.u32 %v342, 7
        %v344 = vsub.s32 0, %v343
        %v345 = vrot.slane %v340, %v344
        %v346 = vlaneseq
        %v347 = vshrl.u32 %v346, 7
        %v348 = vsub.s32 1, %v347
        %v349 = vrot.slane %v340, %v348
        %v354 = vunpack.c.l.b16 %v338
        %v355 = vunpack.c.h.b16 %v338
        %v356 = vunpack.c.l.b16 %v339
        %v357 = vunpack.c.h.b16 %v339
        %v358 = vpack.c.b16 %v356, %v354
        %v359 = vpack.c.b16 %v357, %v355
        %vm362 = vcmask 130048
        %v364 = vsel %vm362, %v330, 0
        %v367 = vsel %vm362, %v331, 0
        %v370 = vsel %vm362, %v332, 0
        %v373 = vsel %vm362, %v333, 0
        %v376 = vsel %vm362, %v334, 0
        %v379 = vsel %vm362, %v335, 0
        %v382 = vsel %vm362, %v336, 0
        %v385 = vsel %vm362, %v337, 0
        %387 = vmatprep.subr.bf16.mxu0 0
        %388 = vmatpush1.bf16.msra.mxu0 0
        %389 = vmatprep.subr.bf16.mxu0 0
        %390 = vmatpush1.bf16.msra.mxu0 0
        %391 = vmatprep.subr.bf16.mxu0 0
        %392 = vmatpush1.bf16.msra.mxu0 0
        %393 = vmatprep.subr.bf16.mxu0 0
        %394 = vmatpush1.bf16.msra.mxu0 0
        %395 = vmatprep.subr.bf16.mxu0 0
        %396 = vmatpush1.bf16.msra.mxu0 0
        %397 = vmatprep.subr.bf16.mxu0 0
        %398 = vmatpush1.bf16.msra.mxu0 0
        %399 = vmatprep.subr.bf16.mxu0 0
        %400 = vmatpush1.bf16.msra.mxu0 0
        %401 = vmatprep.subr.bf16.mxu0 %v359
        %402 = vmatpush1.bf16.msra.mxu0 %v358
        %403 = vmatprep.subr.bf16.mxu0 0
        %404 = vmatpush2.bf16.msra.mxu0 0
        %405 = vmatprep.subr.bf16.mxu0 0
        %406 = vmatpush2.bf16.msra.mxu0 0
        %407 = vmatprep.subr.bf16.mxu0 0
        %408 = vmatpush2.bf16.msra.mxu0 0
        %409 = vmatprep.subr.bf16.mxu0 0
        %410 = vmatpush2.bf16.msra.mxu0 0
        %411 = vmatprep.subr.bf16.mxu0 0
        %412 = vmatpush2.bf16.msra.mxu0 0
        %413 = vmatprep.subr.bf16.mxu0 0
        %414 = vmatpush2.bf16.msra.mxu0 0
        %415 = vmatprep.subr.bf16.mxu0 0
        %416 = vmatpush2.bf16.msra.mxu0 0
        %417 = vmatprep.subr.bf16.mxu0 0
        %418 = vmatpush2.bf16.msra.mxu0 0
        %419 = vmatprep.mubr.bf16.mxu0 0
        %420 = vmatmul.mubr.bf16.gmra.mxu0 %v364
        %v421 = vpop.f32.mrf.mxu0
        %v422 = vadd.f32 %v345, %v421
        %v423 = vpop.f32.mrf.mxu0
        %v424 = vadd.f32 %v349, %v423
        %v425 = vpop.f32.mrf.mxu0
        %v426 = vadd.f32 %v345, %v425
        %v427 = vpop.f32.mrf.mxu0
        %v428 = vadd.f32 %v349, %v427
        %429 = vmatprep.mubr.bf16.mxu0 0
        %430 = vmatmul.mubr.bf16.gmra.mxu0 %v367
        %v431 = vpop.f32.mrf.mxu0
        %v432 = vadd.f32 %v345, %v431
        %v433 = vpop.f32.mrf.mxu0
        %v434 = vadd.f32 %v349, %v433
        %v435 = vpop.f32.mrf.mxu0
        %v436 = vadd.f32 %v345, %v435
        %v437 = vpop.f32.mrf.mxu0
        %v438 = vadd.f32 %v349, %v437
        %439 = vmatprep.mubr.bf16.mxu0 0
        %440 = vmatmul.mubr.bf16.gmra.mxu0 %v370
        %v441 = vpop.f32.mrf.mxu0
        %v442 = vadd.f32 %v345, %v441
        %v443 = vpop.f32.mrf.mxu0
        %v444 = vadd.f32 %v349, %v443
        %v445 = vpop.f32.mrf.mxu0
        %v446 = vadd.f32 %v345, %v445
        %v447 = vpop.f32.mrf.mxu0
        %v448 = vadd.f32 %v349, %v447
        %449 = vmatprep.mubr.bf16.mxu0 0
        %450 = vmatmul.mubr.bf16.gmra.mxu0 %v373
        %v451 = vpop.f32.mrf.mxu0
        %v452 = vadd.f32 %v345, %v451
        %v453 = vpop.f32.mrf.mxu0
        %v454 = vadd.f32 %v349, %v453
        %v455 = vpop.f32.mrf.mxu0
        %v456 = vadd.f32 %v345, %v455
        %v457 = vpop.f32.mrf.mxu0
        %v458 = vadd.f32 %v349, %v457
        %459 = vmatprep.mubr.bf16.mxu0 0
        %460 = vmatmul.mubr.bf16.gmra.mxu0 %v376
        %v461 = vpop.f32.mrf.mxu0
        %v462 = vadd.f32 %v345, %v461
        %v463 = vpop.f32.mrf.mxu0
        %v464 = vadd.f32 %v349, %v463
        %v465 = vpop.f32.mrf.mxu0
        %v466 = vadd.f32 %v345, %v465
        %v467 = vpop.f32.mrf.mxu0
        %v468 = vadd.f32 %v349, %v467
        %469 = vmatprep.mubr.bf16.mxu0 0
        %470 = vmatmul.mubr.bf16.gmra.mxu0 %v379
        %v471 = vpop.f32.mrf.mxu0
        %v472 = vadd.f32 %v345, %v471
        %v473 = vpop.f32.mrf.mxu0
        %v474 = vadd.f32 %v349, %v473
        %v475 = vpop.f32.mrf.mxu0
        %v476 = vadd.f32 %v345, %v475
        %v477 = vpop.f32.mrf.mxu0
        %v478 = vadd.f32 %v349, %v477
        %479 = vmatprep.mubr.bf16.mxu0 0
        %480 = vmatmul.mubr.bf16.gmra.mxu0 %v382
        %v481 = vpop.f32.mrf.mxu0
        %v482 = vadd.f32 %v345, %v481
        %v483 = vpop.f32.mrf.mxu0
        %v484 = vadd.f32 %v349, %v483
        %v485 = vpop.f32.mrf.mxu0
        %v486 = vadd.f32 %v345, %v485
        %v487 = vpop.f32.mrf.mxu0
        %v488 = vadd.f32 %v349, %v487
        %489 = vmatprep.mubr.bf16.mxu0 0
        %490 = vmatmul.mubr.bf16.gmra.mxu0 %v385
        %v491 = vpop.f32.mrf.mxu0
        %v492 = vadd.f32 %v345, %v491
        %v493 = vpop.f32.mrf.mxu0
        %v494 = vadd.f32 %v349, %v493
        %v495 = vpop.f32.mrf.mxu0
        %v496 = vadd.f32 %v345, %v495
        %v497 = vpop.f32.mrf.mxu0
        %v498 = vadd.f32 %v349, %v497
        %499 = vdwg.mxu0
        %v500 = vmax.f32 %v422, 0.0
        %v501 = vmax.f32 %v424, 0.0
        %v502 = vmax.f32 %v426, 0.0
        %v503 = vmax.f32 %v428, 0.0
        %v504 = vmax.f32 %v432, 0.0
        %v505 = vmax.f32 %v434, 0.0
        %v506 = vmax.f32 %v436, 0.0
        %v507 = vmax.f32 %v438, 0.0
        %v508 = vmax.f32 %v442, 0.0
        %v509 = vmax.f32 %v444, 0.0
        %v510 = vmax.f32 %v446, 0.0
        %v511 = vmax.f32 %v448, 0.0
        %v512 = vmax.f32 %v452, 0.0
        %v513 = vmax.f32 %v454, 0.0
        %v514 = vmax.f32 %v456, 0.0
        %v515 = vmax.f32 %v458, 0.0
        %v516 = vmax.f32 %v462, 0.0
        %v517 = vmax.f32 %v464, 0.0
        %v518 = vmax.f32 %v466, 0.0
        %v519 = vmax.f32 %v468, 0.0
        %v520 = vmax.f32 %v472, 0.0
        %v521 = vmax.f32 %v474, 0.0
        %v522 = vmax.f32 %v476, 0.0
        %v523 = vmax.f32 %v478, 0.0
        %v524 = vmax.f32 %v482, 0.0
        %v525 = vmax.f32 %v484, 0.0
        %v526 = vmax.f32 %v486, 0.0
        %v527 = vmax.f32 %v488, 0.0
        %v528 = vmax.f32 %v492, 0.0
        %v529 = vmax.f32 %v494, 0.0
        %v530 = vmax.f32 %v496, 0.0
        %v531 = vmax.f32 %v498, 0.0
        %v532 = vpack.c.bf16 %v502, %v500
        %v533 = vpack.c.bf16 %v503, %v501
        %v534 = vpack.c.bf16 %v506, %v504
        %v535 = vpack.c.bf16 %v507, %v505
        %v536 = vpack.c.bf16 %v510, %v508
        %v537 = vpack.c.bf16 %v511, %v509
        %v538 = vpack.c.bf16 %v514, %v512
        %v539 = vpack.c.bf16 %v515, %v513
        %v540 = vpack.c.bf16 %v518, %v516
        %v541 = vpack.c.bf16 %v519, %v517
        %v542 = vpack.c.bf16 %v522, %v520
        %v543 = vpack.c.bf16 %v523, %v521
        %v544 = vpack.c.bf16 %v526, %v524
        %v545 = vpack.c.bf16 %v527, %v525
        %v546 = vpack.c.bf16 %v530, %v528
        %v547 = vpack.c.bf16 %v531, %v529
        %v548 = vld [vmem:[#allocation3] sm:$0xff]
        %v549 = vld [vmem:[#allocation3 + $0x8] sm:$0xff]
        %v550 = vld [vmem:[#allocation3 + $0x10] sm:$0xff]
        %v551 = vld [vmem:[#allocation3 + $0x18] sm:$0xff]
        %v552 = vld [vmem:[#allocation3 + $0x20] sm:$0xff]
        %v553 = vld [vmem:[#allocation3 + $0x28] sm:$0xff]
        %v554 = vld [vmem:[#allocation3 + $0x30] sm:$0xff]
        %v555 = vld [vmem:[#allocation3 + $0x38] sm:$0xff]
        %v556 = vld [vmem:[#allocation3 + $0x40] sm:$0xff]
        %v557 = vld [vmem:[#allocation3 + $0x48] sm:$0xff]
        %v558 = vld [vmem:[#allocation3 + $0x50] sm:$0xff]
        %v559 = vld [vmem:[#allocation3 + $0x58] sm:$0xff]
        %v560 = vld [vmem:[#allocation3 + $0x60] sm:$0xff]
        %v561 = vld [vmem:[#allocation3 + $0x68] sm:$0xff]
        %v562 = vld [vmem:[#allocation3 + $0x70] sm:$0xff]
        %v563 = vld [vmem:[#allocation3 + $0x78] sm:$0xff]
        %v564 = vld [vmem:[#allocation3 + $0x80] sm:$0xff]
        %v565 = vld [vmem:[#allocation3 + $0x88] sm:$0xff]
        %v566 = vld [vmem:[#allocation3 + $0x90] sm:$0xff]
        %v567 = vld [vmem:[#allocation3 + $0x98] sm:$0xff]
        %v568 = vld [vmem:[#allocation3 + $0xa0] sm:$0xff]
        %v569 = vld [vmem:[#allocation3 + $0xa8] sm:$0xff]
        %v570 = vld [vmem:[#allocation3 + $0xb0] sm:$0xff]
        %v571 = vld [vmem:[#allocation3 + $0xb8] sm:$0xff]
        %v572 = vld [vmem:[#allocation3 + $0xc0] sm:$0xff]
        %v573 = vld [vmem:[#allocation3 + $0xc8] sm:$0xff]
        %v574 = vld [vmem:[#allocation3 + $0xd0] sm:$0xff]
        %v575 = vld [vmem:[#allocation3 + $0xd8] sm:$0xff]
        %v576 = vld [vmem:[#allocation3 + $0xe0] sm:$0xff]
        %v577 = vld [vmem:[#allocation3 + $0xe8] sm:$0xff]
        %v578 = vld [vmem:[#allocation3 + $0xf0] sm:$0xff]
        %v579 = vld [vmem:[#allocation3 + $0xf8] sm:$0xff]
        %v580 = vld [vmem:[%s4] sm:$0x3]
        %v582 = vlaneseq
        %v583 = vshrl.u32 %v582, 7
        %v584 = vsub.s32 0, %v583
        %v585 = vrot.slane %v580, %v584
        %v586 = vlaneseq
        %v587 = vshrl.u32 %v586, 7
        %v588 = vsub.s32 1, %v587
        %v589 = vrot.slane %v580, %v588
        %v624 = vunpack.c.l.b16 %v548
        %v625 = vunpack.c.h.b16 %v548
        %v626 = vunpack.c.l.b16 %v549
        %v627 = vunpack.c.h.b16 %v549
        %v628 = vunpack.c.l.b16 %v550
        %v629 = vunpack.c.h.b16 %v550
        %v630 = vunpack.c.l.b16 %v551
        %v631 = vunpack.c.h.b16 %v551
        %v632 = vunpack.c.l.b16 %v552
        %v633 = vunpack.c.h.b16 %v552
        %v634 = vunpack.c.l.b16 %v553
        %v635 = vunpack.c.h.b16 %v553
        %v636 = vunpack.c.l.b16 %v554
        %v637 = vunpack.c.h.b16 %v554
        %v638 = vunpack.c.l.b16 %v555
        %v639 = vunpack.c.h.b16 %v555
        %v640 = vunpack.c.l.b16 %v556
        %v641 = vunpack.c.h.b16 %v556
        %v642 = vunpack.c.l.b16 %v557
        %v643 = vunpack.c.h.b16 %v557
        %v644 = vunpack.c.l.b16 %v558
        %v645 = vunpack.c.h.b16 %v558
        %v646 = vunpack.c.l.b16 %v559
        %v647 = vunpack.c.h.b16 %v559
        %v648 = vunpack.c.l.b16 %v560
        %v649 = vunpack.c.h.b16 %v560
        %v650 = vunpack.c.l.b16 %v561
        %v651 = vunpack.c.h.b16 %v561
        %v652 = vunpack.c.l.b16 %v562
        %v653 = vunpack.c.h.b16 %v562
        %v654 = vunpack.c.l.b16 %v563
        %v655 = vunpack.c.h.b16 %v563
        %v656 = vunpack.c.l.b16 %v564
        %v657 = vunpack.c.h.b16 %v564
        %v658 = vunpack.c.l.b16 %v565
        %v659 = vunpack.c.h.b16 %v565
        %v660 = vunpack.c.l.b16 %v566
        %v661 = vunpack.c.h.b16 %v566
        %v662 = vunpack.c.l.b16 %v567
        %v663 = vunpack.c.h.b16 %v567
        %v664 = vunpack.c.l.b16 %v568
        %v665 = vunpack.c.h.b16 %v568
        %v666 = vunpack.c.l.b16 %v569
        %v667 = vunpack.c.h.b16 %v569
        %v668 = vunpack.c.l.b16 %v570
        %v669 = vunpack.c.h.b16 %v570
        %v670 = vunpack.c.l.b16 %v571
        %v671 = vunpack.c.h.b16 %v571
        %v672 = vunpack.c.l.b16 %v572
        %v673 = vunpack.c.h.b16 %v572
        %v674 = vunpack.c.l.b16 %v573
        %v675 = vunpack.c.h.b16 %v573
        %v676 = vunpack.c.l.b16 %v574
        %v677 = vunpack.c.h.b16 %v574
        %v678 = vunpack.c.l.b16 %v575
        %v679 = vunpack.c.h.b16 %v575
        %v680 = vunpack.c.l.b16 %v576
        %v681 = vunpack.c.h.b16 %v576
        %v682 = vunpack.c.l.b16 %v577
        %v683 = vunpack.c.h.b16 %v577
        %v684 = vunpack.c.l.b16 %v578
        %v685 = vunpack.c.h.b16 %v578
        %v686 = vunpack.c.l.b16 %v579
        %v687 = vunpack.c.h.b16 %v579
        %v688 = vpack.c.b16 %v626, %v624
        %v689 = vpack.c.b16 %v627, %v625
        %v690 = vpack.c.b16 %v630, %v628
        %v691 = vpack.c.b16 %v631, %v629
        %v692 = vpack.c.b16 %v634, %v632
        %v693 = vpack.c.b16 %v635, %v633
        %v694 = vpack.c.b16 %v638, %v636
        %v695 = vpack.c.b16 %v639, %v637
        %v696 = vpack.c.b16 %v642, %v640
        %v697 = vpack.c.b16 %v643, %v641
        %v698 = vpack.c.b16 %v646, %v644
        %v699 = vpack.c.b16 %v647, %v645
        %v700 = vpack.c.b16 %v650, %v648
        %v701 = vpack.c.b16 %v651, %v649
        %v702 = vpack.c.b16 %v654, %v652
        %v703 = vpack.c.b16 %v655, %v653
        %v704 = vpack.c.b16 %v658, %v656
        %v705 = vpack.c.b16 %v659, %v657
        %v706 = vpack.c.b16 %v662, %v660
        %v707 = vpack.c.b16 %v663, %v661
        %v708 = vpack.c.b16 %v666, %v664
        %v709 = vpack.c.b16 %v667, %v665
        %v710 = vpack.c.b16 %v670, %v668
        %v711 = vpack.c.b16 %v671, %v669
        %v712 = vpack.c.b16 %v674, %v672
        %v713 = vpack.c.b16 %v675, %v673
        %v714 = vpack.c.b16 %v678, %v676
        %v715 = vpack.c.b16 %v679, %v677
        %v716 = vpack.c.b16 %v682, %v680
        %v717 = vpack.c.b16 %v683, %v681
        %v718 = vpack.c.b16 %v686, %v684
        %v719 = vpack.c.b16 %v687, %v685
        %752 = vmatprep.subr.bf16.mxu0 %v703
        %753 = vmatpush1.bf16.msra.mxu0 %v702
        %754 = vmatprep.subr.bf16.mxu0 %v701
        %755 = vmatpush1.bf16.msra.mxu0 %v700
        %756 = vmatprep.subr.bf16.mxu0 %v699
        %757 = vmatpush1.bf16.msra.mxu0 %v698
        %758 = vmatprep.subr.bf16.mxu0 %v697
        %759 = vmatpush1.bf16.msra.mxu0 %v696
        %760 = vmatprep.subr.bf16.mxu0 %v695
        %761 = vmatpush1.bf16.msra.mxu0 %v694
        %762 = vmatprep.subr.bf16.mxu0 %v693
        %763 = vmatpush1.bf16.msra.mxu0 %v692
        %764 = vmatprep.subr.bf16.mxu0 %v691
        %765 = vmatpush1.bf16.msra.mxu0 %v690
        %766 = vmatprep.subr.bf16.mxu0 %v689
        %767 = vmatpush1.bf16.msra.mxu0 %v688
        %768 = vmatprep.subr.bf16.mxu0 %v719
        %769 = vmatpush2.bf16.msra.mxu0 %v718
        %770 = vmatprep.subr.bf16.mxu0 %v717
        %771 = vmatpush2.bf16.msra.mxu0 %v716
        %772 = vmatprep.subr.bf16.mxu0 %v715
        %773 = vmatpush2.bf16.msra.mxu0 %v714
        %774 = vmatprep.subr.bf16.mxu0 %v713
        %775 = vmatpush2.bf16.msra.mxu0 %v712
        %776 = vmatprep.subr.bf16.mxu0 %v711
        %777 = vmatpush2.bf16.msra.mxu0 %v710
        %778 = vmatprep.subr.bf16.mxu0 %v709
        %779 = vmatpush2.bf16.msra.mxu0 %v708
        %780 = vmatprep.subr.bf16.mxu0 %v707
        %781 = vmatpush2.bf16.msra.mxu0 %v706
        %782 = vmatprep.subr.bf16.mxu0 %v705
        %783 = vmatpush2.bf16.msra.mxu0 %v704
        %784 = vmatprep.mubr.bf16.mxu0 %v533
        %785 = vmatmul.mubr.bf16.gmra.mxu0 %v532
        %v786 = vpop.f32.mrf.mxu0
        %v787 = vadd.f32 %v585, %v786
        %v788 = vpop.f32.mrf.mxu0
        %v789 = vadd.f32 %v589, %v788
        %v790 = vpop.f32.mrf.mxu0
        %v791 = vadd.f32 %v585, %v790
        %v792 = vpop.f32.mrf.mxu0
        %v793 = vadd.f32 %v589, %v792
        %794 = vmatprep.mubr.bf16.mxu0 %v535
        %795 = vmatmul.mubr.bf16.gmra.mxu0 %v534
        %v796 = vpop.f32.mrf.mxu0
        %v797 = vadd.f32 %v585, %v796
        %v798 = vpop.f32.mrf.mxu0
        %v799 = vadd.f32 %v589, %v798
        %v800 = vpop.f32.mrf.mxu0
        %v801 = vadd.f32 %v585, %v800
        %v802 = vpop.f32.mrf.mxu0
        %v803 = vadd.f32 %v589, %v802
        %804 = vmatprep.mubr.bf16.mxu0 %v537
        %805 = vmatmul.mubr.bf16.gmra.mxu0 %v536
        %v806 = vpop.f32.mrf.mxu0
        %v807 = vadd.f32 %v585, %v806
        %v808 = vpop.f32.mrf.mxu0
        %v809 = vadd.f32 %v589, %v808
        %v810 = vpop.f32.mrf.mxu0
        %v811 = vadd.f32 %v585, %v810
        %v812 = vpop.f32.mrf.mxu0
        %v813 = vadd.f32 %v589, %v812
        %814 = vmatprep.mubr.bf16.mxu0 %v539
        %815 = vmatmul.mubr.bf16.gmra.mxu0 %v538
        %v816 = vpop.f32.mrf.mxu0
        %v817 = vadd.f32 %v585, %v816
        %v818 = vpop.f32.mrf.mxu0
        %v819 = vadd.f32 %v589, %v818
        %v820 = vpop.f32.mrf.mxu0
        %v821 = vadd.f32 %v585, %v820
        %v822 = vpop.f32.mrf.mxu0
        %v823 = vadd.f32 %v589, %v822
        %824 = vmatprep.mubr.bf16.mxu0 %v541
        %825 = vmatmul.mubr.bf16.gmra.mxu0 %v540
        %v826 = vpop.f32.mrf.mxu0
        %v827 = vadd.f32 %v585, %v826
        %v828 = vpop.f32.mrf.mxu0
        %v829 = vadd.f32 %v589, %v828
        %v830 = vpop.f32.mrf.mxu0
        %v831 = vadd.f32 %v585, %v830
        %v832 = vpop.f32.mrf.mxu0
        %v833 = vadd.f32 %v589, %v832
        %834 = vmatprep.mubr.bf16.mxu0 %v543
        %835 = vmatmul.mubr.bf16.gmra.mxu0 %v542
        %v836 = vpop.f32.mrf.mxu0
        %v837 = vadd.f32 %v585, %v836
        %v838 = vpop.f32.mrf.mxu0
        %v839 = vadd.f32 %v589, %v838
        %v840 = vpop.f32.mrf.mxu0
        %v841 = vadd.f32 %v585, %v840
        %v842 = vpop.f32.mrf.mxu0
        %v843 = vadd.f32 %v589, %v842
        %844 = vmatprep.mubr.bf16.mxu0 %v545
        %845 = vmatmul.mubr.bf16.gmra.mxu0 %v544
        %v846 = vpop.f32.mrf.mxu0
        %v847 = vadd.f32 %v585, %v846
        %v848 = vpop.f32.mrf.mxu0
        %v849 = vadd.f32 %v589, %v848
        %v850 = vpop.f32.mrf.mxu0
        %v851 = vadd.f32 %v585, %v850
        %v852 = vpop.f32.mrf.mxu0
        %v853 = vadd.f32 %v589, %v852
        %854 = vmatprep.mubr.bf16.mxu0 %v547
        %855 = vmatmul.mubr.bf16.gmra.mxu0 %v546
        %v856 = vpop.f32.mrf.mxu0
        %v857 = vadd.f32 %v585, %v856
        %v858 = vpop.f32.mrf.mxu0
        %v859 = vadd.f32 %v589, %v858
        %v860 = vpop.f32.mrf.mxu0
        %v861 = vadd.f32 %v585, %v860
        %v862 = vpop.f32.mrf.mxu0
        %v863 = vadd.f32 %v589, %v862
        %864 = vdwg.mxu0
        %v865 = vmax.f32 %v787, 0.0
        %v866 = vmax.f32 %v789, 0.0
        %v867 = vmax.f32 %v791, 0.0
        %v868 = vmax.f32 %v793, 0.0
        %v869 = vmax.f32 %v797, 0.0
        %v870 = vmax.f32 %v799, 0.0
        %v871 = vmax.f32 %v801, 0.0
        %v872 = vmax.f32 %v803, 0.0
        %v873 = vmax.f32 %v807, 0.0
        %v874 = vmax.f32 %v809, 0.0
        %v875 = vmax.f32 %v811, 0.0
        %v876 = vmax.f32 %v813, 0.0
        %v877 = vmax.f32 %v817, 0.0
        %v878 = vmax.f32 %v819, 0.0
        %v879 = vmax.f32 %v821, 0.0
        %v880 = vmax.f32 %v823, 0.0
        %v881 = vmax.f32 %v827, 0.0
        %v882 = vmax.f32 %v829, 0.0
        %v883 = vmax.f32 %v831, 0.0
        %v884 = vmax.f32 %v833, 0.0
        %v885 = vmax.f32 %v837, 0.0
        %v886 = vmax.f32 %v839, 0.0
        %v887 = vmax.f32 %v841, 0.0
        %v888 = vmax.f32 %v843, 0.0
        %v889 = vmax.f32 %v847, 0.0
        %v890 = vmax.f32 %v849, 0.0
        %v891 = vmax.f32 %v851, 0.0
        %v892 = vmax.f32 %v853, 0.0
        %v893 = vmax.f32 %v857, 0.0
        %v894 = vmax.f32 %v859, 0.0
        %v895 = vmax.f32 %v861, 0.0
        %v896 = vmax.f32 %v863, 0.0
        %v897 = vld [vmem:[%s5] sm:$0x3]
        %v899 = vlaneseq
        %v900 = vshrl.u32 %v899, 7
        %v901 = vsub.s32 0, %v900
        %v902 = vrot.slane %v897, %v901
        %v903 = vlaneseq
        %v904 = vshrl.u32 %v903, 7
        %v905 = vsub.s32 1, %v904
        %v906 = vrot.slane %v897, %v905
        %v909 = vmul.f32 %v865, %v902
        %v910 = vmul.f32 %v866, %v906
        %v911 = vmul.f32 %v867, %v902
        %v912 = vmul.f32 %v868, %v906
        %v913 = vmul.f32 %v869, %v902
        %v914 = vmul.f32 %v870, %v906
        %v915 = vmul.f32 %v871, %v902
        %v916 = vmul.f32 %v872, %v906
        %v917 = vmul.f32 %v873, %v902
        %v918 = vmul.f32 %v874, %v906
        %v919 = vmul.f32 %v875, %v902
        %v920 = vmul.f32 %v876, %v906
        %v921 = vmul.f32 %v877, %v902
        %v922 = vmul.f32 %v878, %v906
        %v923 = vmul.f32 %v879, %v902
        %v924 = vmul.f32 %v880, %v906
        %v925 = vmul.f32 %v881, %v902
        %v926 = vmul.f32 %v882, %v906
        %v927 = vmul.f32 %v883, %v902
        %v928 = vmul.f32 %v884, %v906
        %v929 = vmul.f32 %v885, %v902
        %v930 = vmul.f32 %v886, %v906
        %v931 = vmul.f32 %v887, %v902
        %v932 = vmul.f32 %v888, %v906
        %v933 = vmul.f32 %v889, %v902
        %v934 = vmul.f32 %v890, %v906
        %v935 = vmul.f32 %v891, %v902
        %v936 = vmul.f32 %v892, %v906
        %v937 = vmul.f32 %v893, %v902
        %v938 = vmul.f32 %v894, %v906
        %v939 = vmul.f32 %v895, %v902
        %v940 = vmul.f32 %v896, %v906
        %v941 = vadd.f32 %v909, %v910
        %942 = vadd.xlane.f32.xlu0 %v941
        %v943 = vpop.xlane.xlu0 %942
        %v944 = vadd.f32 %v911, %v912
        %945 = vadd.xlane.f32.xlu0 %v944
        %v946 = vpop.xlane.xlu0 %945
        %v947 = vadd.f32 %v913, %v914
        %948 = vadd.xlane.f32.xlu0 %v947
        %v949 = vpop.xlane.xlu0 %948
        %v950 = vadd.f32 %v915, %v916
        %951 = vadd.xlane.f32.xlu0 %v950
        %v952 = vpop.xlane.xlu0 %951
        %v953 = vadd.f32 %v917, %v918
        %954 = vadd.xlane.f32.xlu0 %v953
        %v955 = vpop.xlane.xlu0 %954
        %v956 = vadd.f32 %v919, %v920
        %957 = vadd.xlane.f32.xlu0 %v956
        %v958 = vpop.xlane.xlu0 %957
        %v959 = vadd.f32 %v921, %v922
        %960 = vadd.xlane.f32.xlu0 %v959
        %v961 = vpop.xlane.xlu0 %960
        %v962 = vadd.f32 %v923, %v924
        %963 = vadd.xlane.f32.xlu0 %v962
        %v964 = vpop.xlane.xlu0 %963
        %v965 = vadd.f32 %v925, %v926
        %966 = vadd.xlane.f32.xlu0 %v965
        %v967 = vpop.xlane.xlu0 %966
        %v968 = vadd.f32 %v927, %v928
        %969 = vadd.xlane.f32.xlu0 %v968
        %v970 = vpop.xlane.xlu0 %969
        %v971 = vadd.f32 %v929, %v930
        %972 = vadd.xlane.f32.xlu0 %v971
        %v973 = vpop.xlane.xlu0 %972
        %v974 = vadd.f32 %v931, %v932
        %975 = vadd.xlane.f32.xlu0 %v974
        %v976 = vpop.xlane.xlu0 %975
        %v977 = vadd.f32 %v933, %v934
        %978 = vadd.xlane.f32.xlu0 %v977
        %v979 = vpop.xlane.xlu0 %978
        %v980 = vadd.f32 %v935, %v936
        %981 = vadd.xlane.f32.xlu0 %v980
        %v982 = vpop.xlane.xlu0 %981
        %v983 = vadd.f32 %v937, %v938
        %984 = vadd.xlane.f32.xlu0 %v983
        %v985 = vpop.xlane.xlu0 %984
        %v986 = vadd.f32 %v939, %v940
        %987 = vadd.xlane.f32.xlu0 %v986
        %v988 = vpop.xlane.xlu0 %987
        %s989 = sld [smem:[#allocation2]]
        %v990 = vstv %s989
        %v991 = vadd.f32 %v943, %v990
        %v992 = vadd.f32 %v946, %v990
        %v993 = vadd.f32 %v949, %v990
        %v994 = vadd.f32 %v952, %v990
        %v995 = vadd.f32 %v955, %v990
        %v996 = vadd.f32 %v958, %v990
        %v997 = vadd.f32 %v961, %v990
        %v998 = vadd.f32 %v964, %v990
        %v999 = vadd.f32 %v967, %v990
        %v1000 = vadd.f32 %v970, %v990
        %v1001 = vadd.f32 %v973, %v990
        %v1002 = vadd.f32 %v976, %v990
        %v1003 = vadd.f32 %v979, %v990
        %v1004 = vadd.f32 %v982, %v990
        %v1005 = vadd.f32 %v985, %v990
        %v1006 = vadd.f32 %v988, %v990
        %v1023 = vlaneseq
        %v1024 = vand.u32 %v1023, 127
        %v1025 = vlaneseq
        %v1026 = vshrl.u32 %v1025, 7
        %v1027 = vsub.s32 %v1024, %v1026
        %v1028 = vrot.slane %v991, %v1027
        %v1029 = vadd.s32 %v1024, 4294967288
        %v1030 = vlaneseq
        %v1031 = vshrl.u32 %v1030, 7
        %v1032 = vsub.s32 %v1029, %v1031
        %v1033 = vrot.slane %v992, %v1032
        %vm1034 = vcmask 130112
        %v1035 = vsel %vm1034, %v1033, %v1028
        %v1036 = vadd.s32 %v1024, 4294967280
        %v1037 = vlaneseq
        %v1038 = vshrl.u32 %v1037, 7
        %v1039 = vsub.s32 %v1036, %v1038
        %v1040 = vrot.slane %v993, %v1039
        %vm1041 = vcmask 195712
        %v1042 = vsel %vm1041, %v1040, %v1035
        %v1043 = vadd.s32 %v1024, 4294967272
        %v1044 = vlaneseq
        %v1045 = vshrl.u32 %v1044, 7
        %v1046 = vsub.s32 %v1043, %v1045
        %v1047 = vrot.slane %v994, %v1046
        %vm1048 = vcmask 261312
        %v1049 = vsel %vm1048, %v1047, %v1042
        %v1050 = vadd.s32 %v1024, 4294967264
        %v1051 = vlaneseq
        %v1052 = vshrl.u32 %v1051, 7
        %v1053 = vsub.s32 %v1050, %v1052
        %v1054 = vrot.slane %v995, %v1053
        %vm1055 = vcmask 326912
        %v1056 = vsel %vm1055, %v1054, %v1049
        %v1057 = vadd.s32 %v1024, 4294967256
        %v1058 = vlaneseq
        %v1059 = vshrl.u32 %v1058, 7
        %v1060 = vsub.s32 %v1057, %v1059
        %v1061 = vrot.slane %v996, %v1060
        %vm1062 = vcmask 392512
        %v1063 = vsel %vm1062, %v1061, %v1056
        %v1064 = vadd.s32 %v1024, 4294967248
        %v1065 = vlaneseq
        %v1066 = vshrl.u32 %v1065, 7
        %v1067 = vsub.s32 %v1064, %v1066
        %v1068 = vrot.slane %v997, %v1067
        %vm1069 = vcmask 458112
        %v1070 = vsel %vm1069, %v1068, %v1063
        %v1071 = vadd.s32 %v1024, 4294967240
        %v1072 = vlaneseq
        %v1073 = vshrl.u32 %v1072, 7
        %v1074 = vsub.s32 %v1071, %v1073
        %v1075 = vrot.slane %v998, %v1074
        %vm1076 = vcmask 523712
        %v1077 = vsel %vm1076, %v1075, %v1070
        %v1078 = vadd.s32 %v1024, 4294967232
        %v1079 = vlaneseq
        %v1080 = vshrl.u32 %v1079, 7
        %v1081 = vsub.s32 %v1078, %v1080
        %v1082 = vrot.slane %v999, %v1081
        %vm1083 = vcmask 589312
        %v1084 = vsel %vm1083, %v1082, %v1077
        %v1085 = vadd.s32 %v1024, 4294967224
        %v1086 = vlaneseq
        %v1087 = vshrl.u32 %v1086, 7
        %v1088 = vsub.s32 %v1085, %v1087
        %v1089 = vrot.slane %v1000, %v1088
        %vm1090 = vcmask 654912
        %v1091 = vsel %vm1090, %v1089, %v1084
        %v1092 = vadd.s32 %v1024, 4294967216
        %v1093 = vlaneseq
        %v1094 = vshrl.u32 %v1093, 7
        %v1095 = vsub.s32 %v1092, %v1094
        %v1096 = vrot.slane %v1001, %v1095
        %vm1097 = vcmask 720512
        %v1098 = vsel %vm1097, %v1096, %v1091
        %v1099 = vadd.s32 %v1024, 4294967208
        %v1100 = vlaneseq
        %v1101 = vshrl.u32 %v1100, 7
        %v1102 = vsub.s32 %v1099, %v1101
        %v1103 = vrot.slane %v1002, %v1102
        %vm1104 = vcmask 786112
        %v1105 = vsel %vm1104, %v1103, %v1098
        %v1106 = vadd.s32 %v1024, 4294967200
        %v1107 = vlaneseq
        %v1108 = vshrl.u32 %v1107, 7
        %v1109 = vsub.s32 %v1106, %v1108
        %v1110 = vrot.slane %v1003, %v1109
        %vm1111 = vcmask 851712
        %v1112 = vsel %vm1111, %v1110, %v1105
        %v1113 = vadd.s32 %v1024, 4294967192
        %v1114 = vlaneseq
        %v1115 = vshrl.u32 %v1114, 7
        %v1116 = vsub.s32 %v1113, %v1115
        %v1117 = vrot.slane %v1004, %v1116
        %vm1118 = vcmask 917312
        %v1119 = vsel %vm1118, %v1117, %v1112
        %v1120 = vadd.s32 %v1024, 4294967184
        %v1121 = vlaneseq
        %v1122 = vshrl.u32 %v1121, 7
        %v1123 = vsub.s32 %v1120, %v1122
        %v1124 = vrot.slane %v1005, %v1123
        %vm1125 = vcmask 982912
        %v1126 = vsel %vm1125, %v1124, %v1119
        %v1127 = vadd.s32 %v1024, 4294967176
        %v1128 = vlaneseq
        %v1129 = vshrl.u32 %v1128, 7
        %v1130 = vsub.s32 %v1127, %v1129
        %v1131 = vrot.slane %v1006, %v1130
        %vm1132 = vcmask 1048512
        %v1133 = vsel %vm1132, %v1131, %v1126
        %1135 = vst [vmem:[%s312] sm:$0x1] %v1133
        %p1136 = scmp.lt.s32.totalorder %s20, 1
        %s1137 = scalar_select %p1136, %s20, 1
        %s1138 = scalar_lea.vmem %s7, %s1137
        // Predicated region
        $region53: #{critic_forward.1} parent=47 // pred_check
          %p1139 = pneg %p190
        $region54: #{critic_forward.1} parent=47 // pred_check_branch
          %1141 = sbr.rel (%p1139) target = $region56
        $region55: #{critic_forward.1} parent=47 // pred_region
          _
        $region56: #{critic_forward.1} parent=47 // pred_fallthru
          _
      $region48: #{critic_forward.1} parent=5 // pred_fallthru
        _
      %p1142 = scmp.le.s32.totalorder 2, %s15
      // Predicated region
      $region57: #{critic_forward.1} parent=5 // pred_check
        %p1143 = pneg %p1142
      $region58: #{critic_forward.1} parent=5 // pred_check_branch
        %1145 = sbr.rel (%p1143) target = $region60
      $region59: #{critic_forward.1} parent=5 // pred_region
        %s1146 = ssub.s32 %s15, 2
        // Predicated region
        $region61: #{critic_forward.1} parent=59 // pred_check
          %p1147 = pneg %p196
        $region62: #{critic_forward.1} parent=59 // pred_check_branch
          %1149 = sbr.rel (%p1147) target = $region64
        $region63: #{critic_forward.1} parent=59 // pred_region
          %p1150 = scmp.lt.s32.totalorder %s21, 1
          %s1151 = scalar_select %p1150, %s21, 1
          %s1152 = scalar_lea.vmem %s7, %s1151
        $region64: #{critic_forward.1} parent=59 // pred_fallthru
          _
      $region60: #{critic_forward.1} parent=5 // pred_fallthru
        _
    $region6: #{critic_forward.1} parent=1 // loop_footer
      %s19 = sadd.s32 1, %s15
    $region7: #{critic_forward.1} parent=1 // loop_footer_branch
      %14 = sbr.rel target = $region3
    $region8: #{critic_forward.1} parent=1 // loop_exit
      _
    %1153 = vsyncpa [#allocation4], 1
    %s1154 = scalar_lea.sflag [#allocation4], 1
    %1155 = vsyncpa %s1154, 1

</llo_original>
